<compile_context>
chip_gen: v6e
topology: v6e:2x2x1
jax: 0.10.0
libtpu: 0.0.40
codegen_flags: <defaults>
</compile_context>

<pallas_src>
import jax
import jax.numpy as jnp
from jax.experimental import pallas as pl
from jax.experimental.pallas import tpu as pltpu


# ----------------------------- Pallas kernel --------------------------------
def gcn_fused_kernel(a_ref, xw1_ref, b1_ref, pa_ref, wc_ref, bc_ref,
                     out_ref, acc_ref):
    i = pl.program_id(0)

    # Zero the pooled accumulator on the first row tile.
    @pl.when(i == 0)
    def _init():
        acc_ref[...] = jnp.zeros_like(acc_ref)

    # conv1 propagation for this node-row tile: h1 = relu(A_tile @ XW1 + b1)
    # (bias add / ReLU kept in f32 on the VPU).
    h1 = jnp.dot(a_ref[...], xw1_ref[...], preferred_element_type=jnp.float32)
    h1 = jnp.maximum(h1 + b1_ref[...], 0.0)

    # F.dropout(p=0.5, training=False) is identity in eval mode.
    # Per-tile pooled accumulation (fuses conv2 propagation + mean pool):
    #   acc += PA[:, tile] @ h1_tile      (PA = pool @ A_hat)
    acc_ref[...] += jnp.dot(pa_ref[...], h1.astype(pa_ref.dtype),
                            preferred_element_type=jnp.float32)

    # Last tile: tiny epilogue  out = acc @ Wc + bc   (Wc = W2 @ W_lin^T).
    @pl.when(i == pl.num_programs(0) - 1)
    def _finalize():
        out_ref[...] = (jnp.dot(acc_ref[...].astype(wc_ref.dtype), wc_ref[...],
                                preferred_element_type=jnp.float32)
                        + bc_ref[...])


# ------------------------------ JAX glue -------------------------------------
def _round_up(v, m):
    return ((v + m - 1) // m) * m


def build_norm_adj(edge_index, edge_weight, num_nodes):
    """Dense normalized adjacency matching PyG gcn_norm (add_remaining_self_loops)."""
    row, col = edge_index[0], edge_index[1]            # row = src, col = dst
    # Add a unit-weight self-loop only for nodes without an explicit one.
    is_loop = (row == col).astype(edge_weight.dtype)
    has_loop = jnp.zeros((num_nodes,), edge_weight.dtype).at[row].add(is_loop) > 0
    loop = jnp.arange(num_nodes, dtype=edge_index.dtype)
    loop_w = jnp.where(has_loop, 0.0, 1.0).astype(edge_weight.dtype)

    row = jnp.concatenate([row, loop])
    col = jnp.concatenate([col, loop])
    ew = jnp.concatenate([edge_weight, loop_w])

    deg = jnp.zeros((num_nodes,), ew.dtype).at[col].add(ew)
    dinv = jnp.where(deg > 0, jax.lax.rsqrt(deg), 0.0)
    norm = dinv[row] * ew * dinv[col]
    a_hat = jnp.zeros((num_nodes, num_nodes), ew.dtype).at[col, row].add(norm)
    return a_hat


def build_pool_matrix(batch, num_graphs):
    """[G, N] matrix with P[g, i] = 1/|graph g| if batch[i] == g else 0."""
    onehot = (batch[None, :] == jnp.arange(num_graphs)[:, None]).astype(jnp.float32)
    counts = onehot.sum(axis=1, keepdims=True)
    return onehot / jnp.maximum(counts, 1.0)


def prepare_inputs(a_hat, x, w1, b1, w2, b2, pool, w_lin_t, b_lin, *, tile_m=512):
    """Algebraic folding + layout padding + bf16 cast. Returns packed operands."""
    n = a_hat.shape[0]
    g = pool.shape[0]
    h = w1.shape[1]
    out_dim = w_lin_t.shape[1]

    # -- algebraic folding (done once, outside the kernel) --
    xw1 = x @ w1                         # [N, H]  hoisted first-layer transform
    pa = pool @ a_hat                    # [G, N]  pooled conv2 propagation
    wc = w2 @ w_lin_t                    # [H, out]
    bc = b2 @ w_lin_t + b_lin            # [1, out]

    # -- tile / padding geometry (lane-dense everywhere) --
    h_pad = _round_up(h, 128)            # hidden 64 -> 128: lane-dense XW1/h1/acc
    g_pad = _round_up(g, 8)              # sublane-dense output rows
    o_pad = _round_up(out_dim, 128)      # lane-dense output store
    # tile_m multiple of 128 (lane-aligned PA column tile, bf16 packing).
    tile_m = max(128, _round_up(min(int(tile_m), _round_up(n, 128)), 128))
    n_pad = _round_up(n, tile_m)

    # NOTE: PA's zero-padded columns (>= n) must stay zero - they cancel the
    # relu(b1) contribution of padded node rows of h1.
    a_p = jnp.zeros((n_pad, n_pad), jnp.float32).at[:n, :n].set(a_hat)
    xw1_p = jnp.zeros((n_pad, h_pad), jnp.float32).at[:n, :h].set(xw1)
    b1_p = jnp.zeros((1, h_pad), jnp.float32).at[:, :h].set(b1)
    pa_p = jnp.zeros((g_pad, n_pad), jnp.float32).at[:g, :n].set(pa)
    wc_p = jnp.zeros((h_pad, o_pad), jnp.float32).at[:h, :out_dim].set(wc)
    bc_p = jnp.zeros((1, o_pad), jnp.float32).at[:, :out_dim].set(bc)

    # bf16 on the MXU operands; accumulation stays f32 in-kernel.
    packed = dict(
        a=a_p.astype(jnp.bfloat16),
        xw1=xw1_p.astype(jnp.bfloat16),
        b1=b1_p,
        pa=pa_p.astype(jnp.bfloat16),
        wc=wc_p.astype(jnp.bfloat16),
        bc=bc_p,
        tile_m=tile_m, n_pad=n_pad, h_pad=h_pad,
        g=g, g_pad=g_pad, out_dim=out_dim, o_pad=o_pad,
    )
    return packed


def _vmem_limit_bytes(tile_m, n_pad, h_pad, g_pad, o_pad):
    """Scoped-VMEM budget: residents + double-buffered streamed tiles + headroom."""
    bf16, f32 = 2, 4
    a_stream = 2 * tile_m * n_pad * bf16          # A row tile, double-buffered
    pa_stream = 2 * g_pad * tile_m * bf16         # PA column tile, double-buffered
    xw1_res = 2 * n_pad * h_pad * bf16            # resident XW1 (pipeline buffers)
    wc_res = 2 * h_pad * o_pad * bf16
    biases = 2 * (h_pad + o_pad) * f32 * 2
    acc = g_pad * h_pad * f32
    out = 2 * g_pad * o_pad * f32
    total = a_stream + pa_stream + xw1_res + wc_res + biases + acc + out
    # 1.5x headroom + 2 MiB for compiler-internal scratch; clamp to [16, 64] MiB
    # (64 MiB = v7x physical VMEM per TensorCore).
    budget = int(1.5 * total) + (2 << 20)
    return min(max(budget, 16 << 20), 64 << 20)


def gcn_forward_pallas(packed):
    tile_m, n_pad = packed["tile_m"], packed["n_pad"]
    h_pad, g_pad, o_pad = packed["h_pad"], packed["g_pad"], packed["o_pad"]
    num_tiles = n_pad // tile_m

    vmem_bytes = _vmem_limit_bytes(tile_m, n_pad, h_pad, g_pad, o_pad)

    # TODO(synk): single-buffer the constant-index residents
    # (pipeline_mode=pl.Buffered(1)) to shave VMEM on v7x once verified.
    out_pad = pl.pallas_call(
        gcn_fused_kernel,
        out_shape=jax.ShapeDtypeStruct((g_pad, o_pad), jnp.float32),
        grid_spec=pltpu.PrefetchScalarGridSpec(
            num_scalar_prefetch=0,
            grid=(num_tiles,),
            in_specs=[
                pl.BlockSpec((tile_m, n_pad), lambda i: (i, 0)),   # A row tile (streamed)
                pl.BlockSpec((n_pad, h_pad), lambda i: (0, 0)),    # XW1 (resident)
                pl.BlockSpec((1, h_pad), lambda i: (0, 0)),        # b1
                pl.BlockSpec((g_pad, tile_m), lambda i: (0, i)),   # PA column tile
                pl.BlockSpec((h_pad, o_pad), lambda i: (0, 0)),    # Wc (resident)
                pl.BlockSpec((1, o_pad), lambda i: (0, 0)),        # bc
            ],
            out_specs=pl.BlockSpec((g_pad, o_pad), lambda i: (0, 0)),
            scratch_shapes=[
                pltpu.VMEM((g_pad, h_pad), jnp.float32),  # pooled accumulator
            ],
        ),
        compiler_params=pltpu.CompilerParams(
            dimension_semantics=("arbitrary",),
            vmem_limit_bytes=vmem_bytes,
        ),
    )(packed["a"], packed["xw1"], packed["b1"],
      packed["pa"], packed["wc"], packed["bc"])

    return out_pad[:packed["g"], :packed["out_dim"]]


def init_params(key, in_channels=268, hidden=64, out_classes=2):
    k1, k2, k3, k4, k5, k6 = jax.random.split(key, 6)

    def glorot(k, shape):
        fan_in, fan_out = shape[0], shape[1]
        limit = (6.0 / (fan_in + fan_out)) ** 0.5
        return jax.random.uniform(k, shape, jnp.float32, -limit, limit)

    w1 = glorot(k1, (in_channels, hidden))        # GCNConv1 weight (as x @ W)
    b1 = 0.1 * jax.random.normal(k4, (1, hidden), jnp.float32)
    w2 = glorot(k2, (hidden, hidden))             # GCNConv2 weight
    b2 = 0.1 * jax.random.normal(k5, (1, hidden), jnp.float32)
    w_lin_t = glorot(k3, (hidden, out_classes))   # nn.Linear weight, pre-transposed
    b_lin = 0.1 * jax.random.normal(k6, (1, out_classes), jnp.float32)
    return w1, b1, w2, b2, w_lin_t, b_lin


# ------------------------------ references ----------------------------------
def gcn_forward_ref_f32(a_hat, x, w1, b1, w2, b2, pool, w_lin_t, b_lin):
    """Original (unfused, full f32) forward, matching the PyTorch module."""
    h1 = jnp.maximum(a_hat @ (x @ w1) + b1, 0.0)
    h2 = a_hat @ (h1 @ w2) + b2
    pooled = pool @ h2
    return pooled @ w_lin_t + b_lin


def gcn_forward_ref_matched(packed):
    """Same math / same bf16 casts as the kernel (tight comparison)."""
    h1 = jnp.maximum(
        jnp.dot(packed["a"], packed["xw1"], preferred_element_type=jnp.float32)
        + packed["b1"], 0.0)
    acc = jnp.dot(packed["pa"], h1.astype(jnp.bfloat16),
                  preferred_element_type=jnp.float32)
    out = jnp.dot(acc.astype(jnp.bfloat16), packed["wc"],
                  preferred_element_type=jnp.float32) + packed["bc"]
    return out[:packed["g"], :packed["out_dim"]]


# --------------------------------- demo --------------------------------------
if __name__ == "__main__":
    key = jax.random.PRNGKey(0)
    k_x, k_ei, k_ew, k_p = jax.random.split(key, 4)

    # Small synthetic graph batch: 200 nodes, 268 features, 400 edges, 2 graphs.
    num_nodes, in_channels, num_edges, num_graphs = 200, 268, 400, 2
    x = jax.random.normal(k_x, (num_nodes, in_channels), jnp.float32)
    edge_index = jax.random.randint(k_ei, (2, num_edges), 0, num_nodes, jnp.int32)
    edge_weight = jax.random.uniform(k_ew, (num_edges,), jnp.float32, 0.1, 1.0)
    batch = jnp.concatenate([
        jnp.zeros((num_nodes // 2,), jnp.int32),
        jnp.ones((num_nodes - num_nodes // 2,), jnp.int32),
    ])

    # Glue: dense normalized adjacency + pooling matrix + parameters.
    a_hat = build_norm_adj(edge_index, edge_weight, num_nodes)
    pool = build_pool_matrix(batch, num_graphs)
    w1, b1, w2, b2, w_lin_t, b_lin = init_params(k_p, in_channels, 64, 2)

    # tile_m=128 at N=200 -> n_pad=256, 2 row tiles (exercises the pooled
    # accumulation across grid steps).  Use 256/512 at realistic N.
    packed = prepare_inputs(a_hat, x, w1, b1, w2, b2, pool, w_lin_t, b_lin,
                            tile_m=128)
    out = gcn_forward_pallas(packed)
    out = jax.block_until_ready(out)
    assert out.shape == (num_graphs, 2)

    # Tight check against an identically-preprocessed (bf16-in / f32-acc) reference.
    ref_matched = gcn_forward_ref_matched(packed)
    assert jnp.allclose(out, ref_matched, atol=2e-3, rtol=2e-3)

    # Loose sanity check against the original full-f32 unfused forward
    # (difference is only from the bf16 MXU inputs).
    ref_f32 = gcn_forward_ref_f32(a_hat, x, w1, b1, w2, b2, pool, w_lin_t, b_lin)
    assert jnp.allclose(out, ref_f32, atol=5e-2, rtol=5e-2)

    print("KERNEL_OK")
</pallas_src>

<mosaic_0001>
module attributes {stable_mosaic.version = 11 : i64} {
  func.func @gcn_fused_kernel(%arg0: i32, %arg1: memref<128x256xbf16, #tpu.memory_space<vmem>>, %arg2: memref<256x128xbf16, #tpu.memory_space<vmem>>, %arg3: memref<1x128xf32, #tpu.memory_space<vmem>>, %arg4: memref<8x128xbf16, #tpu.memory_space<vmem>>, %arg5: memref<128x128xbf16, #tpu.memory_space<vmem>>, %arg6: memref<1x128xf32, #tpu.memory_space<vmem>>, %arg7: memref<8x128xf32, #tpu.memory_space<vmem>>, %arg8: memref<8x128xf32, #tpu.memory_space<vmem>>) attributes {dimension_semantics = [#tpu.dimension_semantics<arbitrary>], iteration_bounds = array<i64: 2>, scalar_prefetch = 0 : i64, scratch_operands = 1 : i64, tpu.core_type = #tpu.core_type<tc>, window_params = [{transform_indices = @transform_0, window_bounds = array<i64: 128, 256>}, {pipeline_mode = #tpu.pipeline_mode<synchronous>, transform_indices = @transform_1, window_bounds = array<i64: 256, 128>}, {pipeline_mode = #tpu.pipeline_mode<synchronous>, transform_indices = @transform_2, window_bounds = array<i64: 1, 128>}, {transform_indices = @transform_3, window_bounds = array<i64: 8, 128>}, {pipeline_mode = #tpu.pipeline_mode<synchronous>, transform_indices = @transform_4, window_bounds = array<i64: 128, 128>}, {pipeline_mode = #tpu.pipeline_mode<synchronous>, transform_indices = @transform_5, window_bounds = array<i64: 1, 128>}, {pipeline_mode = #tpu.pipeline_mode<synchronous>, transform_indices = @transform_6, window_bounds = array<i64: 8, 128>}]} {
    %c0_i32 = arith.constant 0 : i32
    %0 = arith.cmpi eq, %arg0, %c0_i32 : i32
    %1 = arith.extui %0 : i1 to i32
    %c0_i32_0 = arith.constant 0 : i32
    %2 = arith.cmpi ne, %1, %c0_i32_0 : i32
    scf.if %2 {
      %cst_15 = arith.constant 0.000000e+00 : f32
      %20 = vector.broadcast %cst_15 : f32 to vector<8x128xf32>
      %c0_16 = arith.constant 0 : index
      %c0_17 = arith.constant 0 : index
      %21 = vector.load %arg8[%c0_16, %c0_17] : memref<8x128xf32, #tpu.memory_space<vmem>>, vector<8x128xf32>
      tpu.vector_store %arg8[%c0_16, %c0_17], %20 {strides = array<i32>} : memref<8x128xf32, #tpu.memory_space<vmem>>, vector<8x128xf32>,
    } else {
    }
    %c0 = arith.constant 0 : index
    %c0_1 = arith.constant 0 : index
    %3 = vector.load %arg1[%c0, %c0_1] : memref<128x256xbf16, #tpu.memory_space<vmem>>, vector<128x256xbf16>
    %c0_2 = arith.constant 0 : index
    %c0_3 = arith.constant 0 : index
    %4 = vector.load %arg2[%c0_2, %c0_3] : memref<256x128xbf16, #tpu.memory_space<vmem>>, vector<256x128xbf16>
    %cst = arith.constant dense<0.000000e+00> : vector<128x128xf32>
    %5 = tpu.matmul %3, %4, %cst {dimension_numbers = #tpu.dot_dimension_numbers<[1], [0], [0], [1], [0, 0, 1, 1], [], []>} : vector<128x256xbf16>, vector<256x128xbf16>, vector<128x128xf32> -> vector<128x128xf32>
    %c0_4 = arith.constant 0 : index
    %c0_5 = arith.constant 0 : index
    %6 = vector.load %arg3[%c0_4, %c0_5] : memref<1x128xf32, #tpu.memory_space<vmem>>, vector<1x128xf32>
    %7 = vector.broadcast %6 : vector<1x128xf32> to vector<128x128xf32>
    %8 = arith.addf %5, %7 : vector<128x128xf32>
    %cst_6 = arith.constant 0.000000e+00 : f32
    %9 = vector.broadcast %cst_6 : f32 to vector<128x128xf32>
    %10 = arith.maximumf %8, %9 : vector<128x128xf32>
    %c0_7 = arith.constant 0 : index
    %c0_8 = arith.constant 0 : index
    %11 = vector.load %arg8[%c0_7, %c0_8] : memref<8x128xf32, #tpu.memory_space<vmem>>, vector<8x128xf32>
    %c0_9 = arith.constant 0 : index
    %c0_10 = arith.constant 0 : index
    %12 = vector.load %arg4[%c0_9, %c0_10] : memref<8x128xbf16, #tpu.memory_space<vmem>>, vector<8x128xbf16>
    %13 = arith.truncf %10 : vector<128x128xf32> to vector<128x128xbf16>
    %cst_11 = arith.constant dense<0.000000e+00> : vector<8x128xf32>
    %14 = tpu.matmul %12, %13, %cst_11 {dimension_numbers = #tpu.dot_dimension_numbers<[1], [0], [0], [1], [0, 0, 1, 1], [], []>} : vector<8x128xbf16>, vector<128x128xbf16>, vector<8x128xf32> -> vector<8x128xf32>
    %15 = arith.addf %11, %14 : vector<8x128xf32>
    %c0_12 = arith.constant 0 : index
    %c0_13 = arith.constant 0 : index
    %16 = vector.load %arg8[%c0_12, %c0_13] : memref<8x128xf32, #tpu.memory_space<vmem>>, vector<8x128xf32>
    tpu.vector_store %arg8[%c0_12, %c0_13], %15 {strides = array<i32>} : memref<8x128xf32, #tpu.memory_space<vmem>>, vector<8x128xf32>,
    %c1_i32 = arith.constant 1 : i32
    %17 = arith.cmpi eq, %arg0, %c1_i32 : i32
    %18 = arith.extui %17 : i1 to i32
    %c0_i32_14 = arith.constant 0 : i32
    %19 = arith.cmpi ne, %18, %c0_i32_14 : i32
    scf.if %19 {
      %c0_15 = arith.constant 0 : index
      %c0_16 = arith.constant 0 : index
      %20 = vector.load %arg8[%c0_15, %c0_16] : memref<8x128xf32, #tpu.memory_space<vmem>>, vector<8x128xf32>
      %21 = arith.truncf %20 : vector<8x128xf32> to vector<8x128xbf16>
      %c0_17 = arith.constant 0 : index
      %c0_18 = arith.constant 0 : index
      %22 = vector.load %arg5[%c0_17, %c0_18] : memref<128x128xbf16, #tpu.memory_space<vmem>>, vector<128x128xbf16>
      %cst_19 = arith.constant dense<0.000000e+00> : vector<8x128xf32>
      %23 = tpu.matmul %21, %22, %cst_19 {dimension_numbers = #tpu.dot_dimension_numbers<[1], [0], [0], [1], [0, 0, 1, 1], [], []>} : vector<8x128xbf16>, vector<128x128xbf16>, vector<8x128xf32> -> vector<8x128xf32>
      %c0_20 = arith.constant 0 : index
      %c0_21 = arith.constant 0 : index
      %24 = vector.load %arg6[%c0_20, %c0_21] : memref<1x128xf32, #tpu.memory_space<vmem>>, vector<1x128xf32>
      %25 = vector.broadcast %24 : vector<1x128xf32> to vector<8x128xf32>
      %26 = arith.addf %23, %25 : vector<8x128xf32>
      %c0_22 = arith.constant 0 : index
      %c0_23 = arith.constant 0 : index
      %27 = vector.load %arg7[%c0_22, %c0_23] : memref<8x128xf32, #tpu.memory_space<vmem>>, vector<8x128xf32>
      tpu.vector_store %arg7[%c0_22, %c0_23], %26 {strides = array<i32>} : memref<8x128xf32, #tpu.memory_space<vmem>>, vector<8x128xf32>,
    } else {
    }
    return
  }
  func.func @transform_0(%arg0: i32) -> (i32, i32) {
    %c0_i32 = arith.constant 0 : i32
    %c0_i32_0 = arith.constant 0 : i32
    return %arg0, %c0_i32 : i32, i32
  }
  func.func @transform_1(%arg0: i32) -> (i32, i32) {
    %c0_i32 = arith.constant 0 : i32
    %c0_i32_0 = arith.constant 0 : i32
    %c0_i32_1 = arith.constant 0 : i32
    return %c0_i32, %c0_i32_0 : i32, i32
  }
  func.func @transform_2(%arg0: i32) -> (i32, i32) {
    %c0_i32 = arith.constant 0 : i32
    %c0_i32_0 = arith.constant 0 : i32
    %c0_i32_1 = arith.constant 0 : i32
    return %c0_i32, %c0_i32_0 : i32, i32
  }
  func.func @transform_3(%arg0: i32) -> (i32, i32) {
    %c0_i32 = arith.constant 0 : i32
    %c0_i32_0 = arith.constant 0 : i32
    return %c0_i32, %arg0 : i32, i32
  }
  func.func @transform_4(%arg0: i32) -> (i32, i32) {
    %c0_i32 = arith.constant 0 : i32
    %c0_i32_0 = arith.constant 0 : i32
    %c0_i32_1 = arith.constant 0 : i32
    return %c0_i32, %c0_i32_0 : i32, i32
  }
  func.func @transform_5(%arg0: i32) -> (i32, i32) {
    %c0_i32 = arith.constant 0 : i32
    %c0_i32_0 = arith.constant 0 : i32
    %c0_i32_1 = arith.constant 0 : i32
    return %c0_i32, %c0_i32_0 : i32, i32
  }
  func.func @transform_6(%arg0: i32) -> (i32, i32) {
    %c0_i32 = arith.constant 0 : i32
    %c0_i32_0 = arith.constant 0 : i32
    %c0_i32_1 = arith.constant 0 : i32
    return %c0_i32, %c0_i32_0 : i32, i32
  }
}

</mosaic_0001>

<llo_original>
// kernel: tpu_custom_call.1
$region0: #{tpu_custom_call.1}
  #allocation0 [shape = 'u32[]', space=smem, size = 0x4, offset = 0x4, fixed_abs, tag = 'smem constant byte address 0x4 - core index']
  #allocation1 [shape = 'u32[144,128]{1,0:T(1,128)}', space=vmem, size = 0x12000, scoped, tag = 'internal scratch']
  #allocation2 [shape = 'f32[8,128]{1,0:T(8,128)}', space=vmem, size = 0x1000, scoped, tag = 'scratch operand']
  %s0 = inlined_call_operand.hbm [shape: bf16[256,256], index: 0, kind: input, shape index: {}]
  %s1 = inlined_call_operand.hbm [shape: bf16[256,128], index: 1, kind: input, shape index: {}]
  %s2 = inlined_call_operand.vmem [shape: f32[1,128], index: 2, kind: input, shape index: {}]
  %s3 = inlined_call_operand.hbm [shape: bf16[8,256], index: 3, kind: input, shape index: {}]
  %s4 = inlined_call_operand.hbm [shape: bf16[128,128], index: 4, kind: input, shape index: {}]
  %s5 = inlined_call_operand.vmem [shape: f32[1,128], index: 5, kind: input, shape index: {}]
  %s6 = inlined_call_operand.hbm [shape: f32[8,128], index: 6, kind: output, shape index: {}]
  %s7 = sld [smem:[#allocation0]]
  $region81: #{tpu_custom_call.1} parent=0
    _
  %s9 = ssub.s32 1, %s7
  %s10 = scalar_select 0, %s9, %s7
  $region1: #{tpu_custom_call.1} parent=0
    #allocation3 [shape = 'u8[131072]{0}', space=vmem, size = 0x20000, scoped, tag = 'input window, operand 0']
    #allocation4 [shape = 's32[2]{0}', space=sflag, size = 0x8, scoped, tag = 'scoped memory for tpu_custom_call.1']
    #allocation5 [shape = 's32[2]{0}', space=sflag, size = 0x8, scoped, tag = 'scoped memory for tpu_custom_call.1']
    #allocation6 [shape = 'u8[65536]{0}', space=vmem, size = 0x10000, scoped, tag = 'input window, operand 1, single buffered']
    #allocation7 [shape = 's32[1]{0}', space=sflag, size = 0x4, scoped, tag = 'scoped memory for tpu_custom_call.1']
    #allocation8 [shape = 'u8[4096]{0}', space=vmem, size = 0x1000, scoped, tag = 'input window, operand 3']
    #allocation9 [shape = 'u8[32768]{0}', space=vmem, size = 0x8000, scoped, tag = 'input window, operand 4, single buffered']
    #allocation10 [shape = 'u8[4096]{0}', space=vmem, size = 0x1000, scoped, tag = 'output window, operand 0, single buffered']
    %11 = vsyncpa [#allocation4], 0
    %s12 = scalar_lea.sflag [#allocation4], 1
    %13 = vsyncpa %s12, 0
    %14 = vsyncpa [#allocation7], 0
    %15 = vsyncpa [#allocation5], 0
    loop: start=0, step=1, limit=4
    $region2: #{tpu_custom_call.1} parent=1 // loop_pre_header
      _
    $region3: #{tpu_custom_call.1} parent=1 // loop_header
      %s17 = sphi 0, %s21
      %p18 = scmp.ge.s32.totalorder %s17, 4
      %s27 = sphi 0, %s29
      %s30 = sphi 0, %s27
      %s31 = sphi 0, %s30
      %s47 = sphi 0, %s31
      %s51 = sphi 0, %s51
      %s53 = sphi 0, %s51
      %s54 = sphi 0, %s53
      %s68 = sphi 0, %s54
      %s72 = sphi 0, %s72
      %s74 = sphi 0, %s72
      %s75 = sphi 0, %s74
      %s89 = sphi 0, %s75
      %s95 = sphi 0, %s97
      %s98 = sphi 0, %s95
      %s99 = sphi 0, %s98
      %s115 = sphi 0, %s99
      %s119 = sphi 0, %s119
      %s121 = sphi 0, %s119
      %s122 = sphi 0, %s121
      %s136 = sphi 0, %s122
      %s140 = sphi 0, %s140
      %s142 = sphi 0, %s140
      %s143 = sphi 0, %s142
      %s157 = sphi 0, %s143
      %s161 = sphi 0, %s161
      %s163 = sphi 0, %s161
      %s164 = sphi 0, %s163
      %s178 = sphi 0, %s164
    $region4: #{tpu_custom_call.1} parent=1 // loop_header_branch
      %20 = sbr.rel (%p18) target = $region8
    $region5: #{tpu_custom_call.1} parent=1 // loop_body
      %s22 = ssub.s32 %s17, 1
      %s23 = ssub.s32 %s17, 2
      %s24 = sadd.s32 %s17, 1
      %s25 = ssub.s32 %s17, %s24
      %p26 = scmp.eq.s32.totalorder %s25, 0
      %s28 = sadd.s32 %s27, 1
      %s29 = scalar_select %p26, %s27, %s28
      %p32 = pneg %p26
      %p33 = scmp.eq.s32.totalorder %s17, 1
      %p34 = por %p32, %p33
      %p35 = scmp.ne.s32.totalorder %s27, %s30
      %p36 = scmp.eq.s32.totalorder %s17, 0
      %p37 = por %p35, %p36
      %p38 = scmp.ne.s32.totalorder %s27, %s30
      %p39 = scmp.eq.s32.totalorder %s22, 1
      %p40 = por %p38, %p39
      %p41 = scmp.ne.s32.totalorder %s30, %s31
      %p42 = scmp.eq.s32.totalorder %s22, 0
      %p43 = por %p41, %p42
      %p44 = scmp.ne.s32.totalorder %s30, %s31
      %p45 = scmp.eq.s32.totalorder %s23, 1
      %p46 = por %p44, %p45
      %p48 = scmp.ne.s32.totalorder %s31, %s47
      %p49 = scmp.eq.s32.totalorder %s23, 0
      %p50 = por %p48, %p49
      %s52 = sadd.s32 %s51, 1
      %p55 = scmp.eq.s32.totalorder %s17, 1
      %p56 = scmp.ne.s32.totalorder %s51, %s53
      %p57 = scmp.eq.s32.totalorder %s17, 0
      %p58 = por %p56, %p57
      %p59 = scmp.ne.s32.totalorder %s51, %s53
      %p60 = scmp.eq.s32.totalorder %s22, 1
      %p61 = por %p59, %p60
      %p62 = scmp.ne.s32.totalorder %s53, %s54
      %p63 = scmp.eq.s32.totalorder %s22, 0
      %p64 = por %p62, %p63
      %p65 = scmp.ne.s32.totalorder %s53, %s54
      %p66 = scmp.eq.s32.totalorder %s23, 1
      %p67 = por %p65, %p66
      %p69 = scmp.ne.s32.totalorder %s54, %s68
      %p70 = scmp.eq.s32.totalorder %s23, 0
      %p71 = por %p69, %p70
      %s73 = sadd.s32 %s72, 1
      %p76 = scmp.eq.s32.totalorder %s17, 1
      %p77 = scmp.ne.s32.totalorder %s72, %s74
      %p78 = scmp.eq.s32.totalorder %s17, 0
      %p79 = por %p77, %p78
      %p80 = scmp.ne.s32.totalorder %s72, %s74
      %p81 = scmp.eq.s32.totalorder %s22, 1
      %p82 = por %p80, %p81
      %p83 = scmp.ne.s32.totalorder %s74, %s75
      %p84 = scmp.eq.s32.totalorder %s22, 0
      %p85 = por %p83, %p84
      %p86 = scmp.ne.s32.totalorder %s74, %s75
      %p87 = scmp.eq.s32.totalorder %s23, 1
      %p88 = por %p86, %p87
      %p90 = scmp.ne.s32.totalorder %s75, %s89
      %p91 = scmp.eq.s32.totalorder %s23, 0
      %p92 = por %p90, %p91
      %s93 = ssub.s32 %s17, %s24
      %p94 = scmp.eq.s32.totalorder %s93, 0
      %s96 = sadd.s32 %s95, 1
      %s97 = scalar_select %p94, %s95, %s96
      %p100 = pneg %p94
      %p101 = scmp.eq.s32.totalorder %s17, 1
      %p102 = por %p100, %p101
      %p103 = scmp.ne.s32.totalorder %s95, %s98
      %p104 = scmp.eq.s32.totalorder %s17, 0
      %p105 = por %p103, %p104
      %p106 = scmp.ne.s32.totalorder %s95, %s98
      %p107 = scmp.eq.s32.totalorder %s22, 1
      %p108 = por %p106, %p107
      %p109 = scmp.ne.s32.totalorder %s98, %s99
      %p110 = scmp.eq.s32.totalorder %s22, 0
      %p111 = por %p109, %p110
      %p112 = scmp.ne.s32.totalorder %s98, %s99
      %p113 = scmp.eq.s32.totalorder %s23, 1
      %p114 = por %p112, %p113
      %p116 = scmp.ne.s32.totalorder %s99, %s115
      %p117 = scmp.eq.s32.totalorder %s23, 0
      %p118 = por %p116, %p117
      %s120 = sadd.s32 %s119, 1
      %p123 = scmp.eq.s32.totalorder %s17, 1
      %p124 = scmp.ne.s32.totalorder %s119, %s121
      %p125 = scmp.eq.s32.totalorder %s17, 0
      %p126 = por %p124, %p125
      %p127 = scmp.ne.s32.totalorder %s119, %s121
      %p128 = scmp.eq.s32.totalorder %s22, 1
      %p129 = por %p127, %p128
      %p130 = scmp.ne.s32.totalorder %s121, %s122
      %p131 = scmp.eq.s32.totalorder %s22, 0
      %p132 = por %p130, %p131
      %p133 = scmp.ne.s32.totalorder %s121, %s122
      %p134 = scmp.eq.s32.totalorder %s23, 1
      %p135 = por %p133, %p134
      %p137 = scmp.ne.s32.totalorder %s122, %s136
      %p138 = scmp.eq.s32.totalorder %s23, 0
      %p139 = por %p137, %p138
      %s141 = sadd.s32 %s140, 1
      %p144 = scmp.eq.s32.totalorder %s17, 1
      %p145 = scmp.ne.s32.totalorder %s140, %s142
      %p146 = scmp.eq.s32.totalorder %s17, 0
      %p147 = por %p145, %p146
      %p148 = scmp.ne.s32.totalorder %s140, %s142
      %p149 = scmp.eq.s32.totalorder %s22, 1
      %p150 = por %p148, %p149
      %p151 = scmp.ne.s32.totalorder %s142, %s143
      %p152 = scmp.eq.s32.totalorder %s22, 0
      %p153 = por %p151, %p152
      %p154 = scmp.ne.s32.totalorder %s142, %s143
      %p155 = scmp.eq.s32.totalorder %s23, 1
      %p156 = por %p154, %p155
      %p158 = scmp.ne.s32.totalorder %s143, %s157
      %p159 = scmp.eq.s32.totalorder %s23, 0
      %p160 = por %p158, %p159
      %s162 = sadd.s32 %s161, 1
      %p165 = scmp.eq.s32.totalorder %s17, 1
      %p166 = scmp.ne.s32.totalorder %s161, %s163
      %p167 = scmp.eq.s32.totalorder %s17, 0
      %p168 = por %p166, %p167
      %p169 = scmp.ne.s32.totalorder %s161, %s163
      %p170 = scmp.eq.s32.totalorder %s22, 1
      %p171 = por %p169, %p170
      %p172 = scmp.ne.s32.totalorder %s163, %s164
      %p173 = scmp.eq.s32.totalorder %s22, 0
      %p174 = por %p172, %p173
      %p175 = scmp.ne.s32.totalorder %s163, %s164
      %p176 = scmp.eq.s32.totalorder %s23, 1
      %p177 = por %p175, %p176
      %p179 = scmp.ne.s32.totalorder %s164, %s178
      %p180 = scmp.eq.s32.totalorder %s23, 0
      %p181 = por %p179, %p180
      %p182 = scmp.le.s32.totalorder 1, %s17
      %p183 = scmp.lt.s32.totalorder %s17, 3
      %p184 = pnand %p182, %p183
      %p185 = pneg %p184
      // Predicated region
      $region9: #{tpu_custom_call.1} parent=5 // pred_check
        _
      $region10: #{tpu_custom_call.1} parent=5 // pred_check_branch
        %187 = sbr.rel (%p184) target = $region12
      $region11: #{tpu_custom_call.1} parent=5 // pred_region
        %s188 = ssub.s32 %s17, 1
        // Predicated region
        $region13: #{tpu_custom_call.1} parent=11 // pred_check
          %p189 = pneg %p64
        $region14: #{tpu_custom_call.1} parent=11 // pred_check_branch
          %191 = sbr.rel (%p189) target = $region16
        $region15: #{tpu_custom_call.1} parent=11 // pred_region
          %s193 = ssub.s32 2048, 2048
          %194 = vsyncadd [#allocation7], %s193
          %s195 = sshll.u32 [#allocation6], 4
          %s196 = int_to_ptr.vmem [resolvable:$true] %s195
          %201 = dma.hbm_to_vmem [thread:$0]  %s1, 2048, %s196, [#allocation7], 64, 64, 4
        $region16: #{tpu_custom_call.1} parent=11 // pred_fallthru
          _
        // Predicated region
        $region17: #{tpu_custom_call.1} parent=11 // pred_check
          %p202 = pneg %p85
        $region18: #{tpu_custom_call.1} parent=11 // pred_check_branch
          %204 = sbr.rel (%p202) target = $region20
        $region19: #{tpu_custom_call.1} parent=11 // pred_region
          _
        $region20: #{tpu_custom_call.1} parent=11 // pred_fallthru
          _
        // Predicated region
        $region21: #{tpu_custom_call.1} parent=11 // pred_check
          %p205 = pneg %p132
        $region22: #{tpu_custom_call.1} parent=11 // pred_check_branch
          %207 = sbr.rel (%p205) target = $region24
        $region23: #{tpu_custom_call.1} parent=11 // pred_region
          %s209 = ssub.s32 1024, 1024
          %210 = vsyncadd [#allocation7], %s209
          %s211 = sshll.u32 [#allocation9], 4
          %s212 = int_to_ptr.vmem [resolvable:$true] %s211
          %217 = dma.hbm_to_vmem [thread:$0]  %s4, 1024, %s212, [#allocation7], 64, 64, 4
        $region24: #{tpu_custom_call.1} parent=11 // pred_fallthru
          _
        // Predicated region
        $region25: #{tpu_custom_call.1} parent=11 // pred_check
          %p218 = pneg %p153
        $region26: #{tpu_custom_call.1} parent=11 // pred_check_branch
          %220 = sbr.rel (%p218) target = $region28
        $region27: #{tpu_custom_call.1} parent=11 // pred_region
          _
        $region28: #{tpu_custom_call.1} parent=11 // pred_fallthru
          _
      $region12: #{tpu_custom_call.1} parent=5 // pred_fallthru
        _
      %p221 = scmp.lt.s32.totalorder %s17, 2
      // Predicated region
      $region29: #{tpu_custom_call.1} parent=5 // pred_check
        %p222 = pneg %p221
      $region30: #{tpu_custom_call.1} parent=5 // pred_check_branch
        %224 = sbr.rel (%p222) target = $region32
      $region31: #{tpu_custom_call.1} parent=5 // pred_region
        // Predicated region
        $region33: #{tpu_custom_call.1} parent=31 // pred_check
          %p225 = pneg %p37
        $region34: #{tpu_custom_call.1} parent=31 // pred_check_branch
          %227 = sbr.rel (%p225) target = $region36
        $region35: #{tpu_custom_call.1} parent=31 // pred_region
          %s228 = sand.u32 %s17, 1
          %s229 = scalar_lea.sflag [#allocation4], %s228
          %s230 = sand.u32 %s27, 1
          %s231 = smul.addr %s230, 128
          %s232 = scalar_lea.vmem [#allocation3], %s231
          %s233 = smul.u32 16, %s17
          %s235 = ssub.s32 2048, 2048
          %236 = vsyncadd %s229, %s235
          %s237 = smul.addr %s233, 2
          %s238 = smul.addr %s237, 64
          %s239 = scalar_lea.hbm %s0, %s238
          %s240 = sshll.u32 %s232, 4
          %s241 = int_to_ptr.vmem [resolvable:$true] %s240
          %246 = dma.hbm_to_vmem [thread:$0]  %s239, 2048, %s241, %s229, 128, 128, 8
        $region36: #{tpu_custom_call.1} parent=31 // pred_fallthru
          _
        // Predicated region
        $region37: #{tpu_custom_call.1} parent=31 // pred_check
          %p247 = pneg %p105
        $region38: #{tpu_custom_call.1} parent=31 // pred_check_branch
          %249 = sbr.rel (%p247) target = $region40
        $region39: #{tpu_custom_call.1} parent=31 // pred_region
          %s250 = sand.u32 %s17, 1
          %s251 = scalar_lea.sflag [#allocation4], %s250
          %s252 = sand.u32 %s95, 1
          %s253 = smul.addr %s252, 4
          %s254 = scalar_lea.vmem [#allocation8], %s253
          %s256 = ssub.s32 64, 64
          %257 = vsyncadd %s251, %s256
          %s258 = smul.addr %s17, 64
          %s259 = scalar_lea.hbm %s3, %s258
          %s261 = sshll.u32 %s254, 4
          %s262 = int_to_ptr.vmem [resolvable:$true] %s261
          %264 = dma.hbm_to_vmem [thread:$0]  %s259, 64, %s262, %s251
        $region40: #{tpu_custom_call.1} parent=31 // pred_fallthru
          _
      $region32: #{tpu_custom_call.1} parent=5 // pred_fallthru
        _
      %p265 = scmp.le.s32.totalorder 1, %s17
      %p266 = scmp.lt.s32.totalorder %s17, 3
      %p267 = pnand %p265, %p266
      %p268 = pneg %p267
      // Predicated region
      $region41: #{tpu_custom_call.1} parent=5 // pred_check
        _
      $region42: #{tpu_custom_call.1} parent=5 // pred_check_branch
        %270 = sbr.rel (%p267) target = $region44
      $region43: #{tpu_custom_call.1} parent=5 // pred_region
        %s271 = ssub.s32 %s17, 1
        %s272 = sand.u32 %s22, 1
        %s273 = scalar_lea.sflag [#allocation4], %s272
        %s274 = sand.u32 %s30, 1
        %s275 = smul.addr %s274, 128
        %s276 = scalar_lea.vmem [#allocation3], %s275
        // Predicated region
        $region45: #{tpu_custom_call.1} parent=43 // pred_check
          %p277 = pneg %p43
        $region46: #{tpu_custom_call.1} parent=43 // pred_check_branch
          %279 = sbr.rel (%p277) target = $region48
        $region47: #{tpu_custom_call.1} parent=43 // pred_region
          %280 = dma.done %s273, 2048
        $region48: #{tpu_custom_call.1} parent=43 // pred_fallthru
          _
        // Predicated region
        $region49: #{tpu_custom_call.1} parent=43 // pred_check
          %p281 = pneg %p64
        $region50: #{tpu_custom_call.1} parent=43 // pred_check_branch
          %283 = sbr.rel (%p281) target = $region52
        $region51: #{tpu_custom_call.1} parent=43 // pred_region
          %284 = dma.done [#allocation7], 2048
        $region52: #{tpu_custom_call.1} parent=43 // pred_fallthru
          _
        %s285 = sand.u32 %s22, 1
        %s286 = scalar_lea.sflag [#allocation4], %s285
        %s287 = sand.u32 %s98, 1
        %s288 = smul.addr %s287, 4
        %s289 = scalar_lea.vmem [#allocation8], %s288
        // Predicated region
        $region53: #{tpu_custom_call.1} parent=43 // pred_check
          %p290 = pneg %p111
        $region54: #{tpu_custom_call.1} parent=43 // pred_check_branch
          %292 = sbr.rel (%p290) target = $region56
        $region55: #{tpu_custom_call.1} parent=43 // pred_region
          %293 = dma.done %s286, 64
        $region56: #{tpu_custom_call.1} parent=43 // pred_fallthru
          _
        // Predicated region
        $region57: #{tpu_custom_call.1} parent=43 // pred_check
          %p294 = pneg %p132
        $region58: #{tpu_custom_call.1} parent=43 // pred_check_branch
          %296 = sbr.rel (%p294) target = $region60
        $region59: #{tpu_custom_call.1} parent=43 // pred_region
          %297 = dma.done [#allocation7], 1024
        $region60: #{tpu_custom_call.1} parent=43 // pred_fallthru
          _
        %s298 = sand.u32 %s22, 1
        %s299 = scalar_lea.sflag [#allocation4], %s298
        %s300 = sand.u32 %s30, 1
        %s301 = smul.addr %s300, 128
        %s302 = scalar_lea.vmem [#allocation3], %s301
        %p303 = pneg %p43
        %p304 = pneg %p40
        %p305 = pneg %p64
        %p306 = pneg %p61
        %p307 = pneg %p85
        %p308 = pneg %p82
        %s309 = sand.u32 %s22, 1
        %s310 = scalar_lea.sflag [#allocation4], %s309
        %s311 = sand.u32 %s98, 1
        %s312 = smul.addr %s311, 4
        %s313 = scalar_lea.vmem [#allocation8], %s312
        %p314 = pneg %p111
        %p315 = pneg %p108
        %p316 = pneg %p132
        %p317 = pneg %p129
        %p318 = pneg %p153
        %p319 = pneg %p150
        %p320 = pneg %p174
        %p321 = pneg %p171
        %s322 = smul.u32 16, %s22
        %p324 = scmp.eq.s32.totalorder %s22, 0
        // Predicated region
        $region61: #{tpu_custom_call.1} parent=43 // pred_check
          %p325 = pneg %p324
        $region62: #{tpu_custom_call.1} parent=43 // pred_check_branch
          %327 = sbr.rel (%p325) target = $region64
        $region63: #{tpu_custom_call.1} parent=43 // pred_region
          %328 = vst [vmem:[#allocation2] sm:$0xff] 0.0
        $region64: #{tpu_custom_call.1} parent=43 // pred_fallthru
          _
        %v329 = vld [vmem:[%s276] sm:$0xff]
        %v330 = vld [vmem:[%s276 + $0x8] sm:$0xff]
        %v331 = vld [vmem:[%s276 + $0x10] sm:$0xff]
        %v332 = vld [vmem:[%s276 + $0x18] sm:$0xff]
        %v333 = vld [vmem:[%s276 + $0x20] sm:$0xff]
        %v334 = vld [vmem:[%s276 + $0x28] sm:$0xff]
        %v335 = vld [vmem:[%s276 + $0x30] sm:$0xff]
        %v336 = vld [vmem:[%s276 + $0x38] sm:$0xff]
        %v337 = vld [vmem:[%s276 + $0x40] sm:$0xff]
        %v338 = vld [vmem:[%s276 + $0x48] sm:$0xff]
        %v339 = vld [vmem:[%s276 + $0x50] sm:$0xff]
        %v340 = vld [vmem:[%s276 + $0x58] sm:$0xff]
        %v341 = vld [vmem:[%s276 + $0x60] sm:$0xff]
        %v342 = vld [vmem:[%s276 + $0x68] sm:$0xff]
        %v343 = vld [vmem:[%s276 + $0x70] sm:$0xff]
        %v344 = vld [vmem:[%s276 + $0x78] sm:$0xff]
        %v345 = vld [vmem:[#allocation6] sm:$0xf]
        %v346 = vld [vmem:[#allocation6 + $0x4] sm:$0xf]
        %v347 = vld [vmem:[#allocation6 + $0x8] sm:$0xf]
        %v348 = vld [vmem:[#allocation6 + $0xc] sm:$0xf]
        %v349 = vld [vmem:[#allocation6 + $0x10] sm:$0xf]
        %v350 = vld [vmem:[#allocation6 + $0x14] sm:$0xf]
        %v351 = vld [vmem:[#allocation6 + $0x18] sm:$0xf]
        %v352 = vld [vmem:[#allocation6 + $0x1c] sm:$0xf]
        %v353 = vld [vmem:[#allocation6 + $0x20] sm:$0xf]
        %v354 = vld [vmem:[#allocation6 + $0x24] sm:$0xf]
        %v355 = vld [vmem:[#allocation6 + $0x28] sm:$0xf]
        %v356 = vld [vmem:[#allocation6 + $0x2c] sm:$0xf]
        %v357 = vld [vmem:[#allocation6 + $0x30] sm:$0xf]
        %v358 = vld [vmem:[#allocation6 + $0x34] sm:$0xf]
        %v359 = vld [vmem:[#allocation6 + $0x38] sm:$0xf]
        %v360 = vld [vmem:[#allocation6 + $0x3c] sm:$0xf]
        %v361 = vld [vmem:[#allocation6 + $0x40] sm:$0xf]
        %v362 = vld [vmem:[#allocation6 + $0x44] sm:$0xf]
        %v363 = vld [vmem:[#allocation6 + $0x48] sm:$0xf]
        %v364 = vld [vmem:[#allocation6 + $0x4c] sm:$0xf]
        %v365 = vld [vmem:[#allocation6 + $0x50] sm:$0xf]
        %v366 = vld [vmem:[#allocation6 + $0x54] sm:$0xf]
        %v367 = vld [vmem:[#allocation6 + $0x58] sm:$0xf]
        %v368 = vld [vmem:[#allocation6 + $0x5c] sm:$0xf]
        %v369 = vld [vmem:[#allocation6 + $0x60] sm:$0xf]
        %v370 = vld [vmem:[#allocation6 + $0x64] sm:$0xf]
        %v371 = vld [vmem:[#allocation6 + $0x68] sm:$0xf]
        %v372 = vld [vmem:[#allocation6 + $0x6c] sm:$0xf]
        %v373 = vld [vmem:[#allocation6 + $0x70] sm:$0xf]
        %v374 = vld [vmem:[#allocation6 + $0x74] sm:$0xf]
        %v375 = vld [vmem:[#allocation6 + $0x78] sm:$0xf]
        %v376 = vld [vmem:[#allocation6 + $0x7c] sm:$0xf]
        %v377 = vld [vmem:[%s2] sm:$0x1]
        %v379 = vlaneseq
        %v380 = vshrl.u32 %v379, 7
        %v381 = vsub.s32 0, %v380
        %v382 = vrot.slane %v377, %v381
        %v400 = vunpack.c.l.b16 %v329
        %v401 = vunpack.c.h.b16 %v329
        %v402 = vunpack.c.l.b16 %v330
        %v403 = vunpack.c.h.b16 %v330
        %v404 = vunpack.c.l.b16 %v331
        %v405 = vunpack.c.h.b16 %v331
        %v406 = vunpack.c.l.b16 %v332
        %v407 = vunpack.c.h.b16 %v332
        %v408 = vunpack.c.l.b16 %v333
        %v409 = vunpack.c.h.b16 %v333
        %v410 = vunpack.c.l.b16 %v334
        %v411 = vunpack.c.h.b16 %v334
        %v412 = vunpack.c.l.b16 %v335
        %v413 = vunpack.c.h.b16 %v335
        %v414 = vunpack.c.l.b16 %v336
        %v415 = vunpack.c.h.b16 %v336
        %v416 = vunpack.c.l.b16 %v337
        %v417 = vunpack.c.h.b16 %v337
        %v418 = vunpack.c.l.b16 %v338
        %v419 = vunpack.c.h.b16 %v338
        %v420 = vunpack.c.l.b16 %v339
        %v421 = vunpack.c.h.b16 %v339
        %v422 = vunpack.c.l.b16 %v340
        %v423 = vunpack.c.h.b16 %v340
        %v424 = vunpack.c.l.b16 %v341
        %v425 = vunpack.c.h.b16 %v341
        %v426 = vunpack.c.l.b16 %v342
        %v427 = vunpack.c.h.b16 %v342
        %v428 = vunpack.c.l.b16 %v343
        %v429 = vunpack.c.h.b16 %v343
        %v430 = vunpack.c.l.b16 %v344
        %v431 = vunpack.c.h.b16 %v344
        %v432 = vpack.c.b16 %v402, %v400
        %v433 = vpack.c.b16 %v403, %v401
        %v434 = vpack.c.b16 %v406, %v404
        %v435 = vpack.c.b16 %v407, %v405
        %v436 = vpack.c.b16 %v410, %v408
        %v437 = vpack.c.b16 %v411, %v409
        %v438 = vpack.c.b16 %v414, %v412
        %v439 = vpack.c.b16 %v415, %v413
        %v440 = vpack.c.b16 %v418, %v416
        %v441 = vpack.c.b16 %v419, %v417
        %v442 = vpack.c.b16 %v422, %v420
        %v443 = vpack.c.b16 %v423, %v421
        %v444 = vpack.c.b16 %v426, %v424
        %v445 = vpack.c.b16 %v427, %v425
        %v446 = vpack.c.b16 %v430, %v428
        %v447 = vpack.c.b16 %v431, %v429
        %v496 = vunpack.c.l.b16 %v345
        %v497 = vunpack.c.l.b16 %v346
        %v498 = vunpack.c.l.b16 %v347
        %v499 = vunpack.c.l.b16 %v348
        %v500 = vunpack.c.l.b16 %v349
        %v501 = vunpack.c.l.b16 %v350
        %v502 = vunpack.c.l.b16 %v351
        %v503 = vunpack.c.l.b16 %v352
        %v504 = vunpack.c.l.b16 %v353
        %v505 = vunpack.c.l.b16 %v354
        %v506 = vunpack.c.l.b16 %v355
        %v507 = vunpack.c.l.b16 %v356
        %v508 = vunpack.c.l.b16 %v357
        %v509 = vunpack.c.l.b16 %v358
        %v510 = vunpack.c.l.b16 %v359
        %v511 = vunpack.c.l.b16 %v360
        %v512 = vunpack.c.l.b16 %v361
        %v513 = vunpack.c.l.b16 %v362
        %v514 = vunpack.c.l.b16 %v363
        %v515 = vunpack.c.l.b16 %v364
        %v516 = vunpack.c.l.b16 %v365
        %v517 = vunpack.c.l.b16 %v366
        %v518 = vunpack.c.l.b16 %v367
        %v519 = vunpack.c.l.b16 %v368
        %v520 = vunpack.c.l.b16 %v369
        %v521 = vunpack.c.l.b16 %v370
        %v522 = vunpack.c.l.b16 %v371
        %v523 = vunpack.c.l.b16 %v372
        %v524 = vunpack.c.l.b16 %v373
        %v525 = vunpack.c.l.b16 %v374
        %v526 = vunpack.c.l.b16 %v375
        %v527 = vunpack.c.l.b16 %v376
        %v528 = vpack.c.b16 %v497, %v496
        %v529 = vpack.c.b16 %v499, %v498
        %v530 = vpack.c.b16 %v501, %v500
        %v531 = vpack.c.b16 %v503, %v502
        %v532 = vpack.c.b16 %v505, %v504
        %v533 = vpack.c.b16 %v507, %v506
        %v534 = vpack.c.b16 %v509, %v508
        %v535 = vpack.c.b16 %v511, %v510
        %v536 = vpack.c.b16 %v513, %v512
        %v537 = vpack.c.b16 %v515, %v514
        %v538 = vpack.c.b16 %v517, %v516
        %v539 = vpack.c.b16 %v519, %v518
        %v540 = vpack.c.b16 %v521, %v520
        %v541 = vpack.c.b16 %v523, %v522
        %v542 = vpack.c.b16 %v525, %v524
        %v543 = vpack.c.b16 %v527, %v526
        %560 = vmatprep.subr.bf16.mxu0 0
        %561 = vmatpush1.bf16.msra.mxu0 %v535
        %562 = vmatprep.subr.bf16.mxu0 0
        %563 = vmatpush1.bf16.msra.mxu0 %v534
        %564 = vmatprep.subr.bf16.mxu0 0
        %565 = vmatpush1.bf16.msra.mxu0 %v533
        %566 = vmatprep.subr.bf16.mxu0 0
        %567 = vmatpush1.bf16.msra.mxu0 %v532
        %568 = vmatprep.subr.bf16.mxu0 0
        %569 = vmatpush1.bf16.msra.mxu0 %v531
        %570 = vmatprep.subr.bf16.mxu0 0
        %571 = vmatpush1.bf16.msra.mxu0 %v530
        %572 = vmatprep.subr.bf16.mxu0 0
        %573 = vmatpush1.bf16.msra.mxu0 %v529
        %574 = vmatprep.subr.bf16.mxu0 0
        %575 = vmatpush1.bf16.msra.mxu0 %v528
        %576 = vmatprep.subr.bf16.mxu0 0
        %577 = vmatpush2.bf16.msra.mxu0 %v543
        %578 = vmatprep.subr.bf16.mxu0 0
        %579 = vmatpush2.bf16.msra.mxu0 %v542
        %580 = vmatprep.subr.bf16.mxu0 0
        %581 = vmatpush2.bf16.msra.mxu0 %v541
        %582 = vmatprep.subr.bf16.mxu0 0
        %583 = vmatpush2.bf16.msra.mxu0 %v540
        %584 = vmatprep.subr.bf16.mxu0 0
        %585 = vmatpush2.bf16.msra.mxu0 %v539
        %586 = vmatprep.subr.bf16.mxu0 0
        %587 = vmatpush2.bf16.msra.mxu0 %v538
        %588 = vmatprep.subr.bf16.mxu0 0
        %589 = vmatpush2.bf16.msra.mxu0 %v537
        %590 = vmatprep.subr.bf16.mxu0 0
        %591 = vmatpush2.bf16.msra.mxu0 %v536
        %592 = vmatprep.mubr.bf16.mxu0 %v433
        %593 = vmatmul.mubr.bf16.gmra.mxu0 %v432
        %v594 = vpop.f32.mrf.mxu0
        %v595 = vadd.f32 %v382, %v594
        %v596 = vpop.f32.mrf.mxu0
        %v597 = vpop.f32.mrf.mxu0
        %v598 = vadd.f32 %v382, %v597
        %v599 = vpop.f32.mrf.mxu0
        %600 = vmatprep.mubr.bf16.mxu0 %v435
        %601 = vmatmul.mubr.bf16.gmra.mxu0 %v434
        %v602 = vpop.f32.mrf.mxu0
        %v603 = vadd.f32 %v382, %v602
        %v604 = vpop.f32.mrf.mxu0
        %v605 = vpop.f32.mrf.mxu0
        %v606 = vadd.f32 %v382, %v605
        %v607 = vpop.f32.mrf.mxu0
        %608 = vmatprep.mubr.bf16.mxu0 %v437
        %609 = vmatmul.mubr.bf16.gmra.mxu0 %v436
        %v610 = vpop.f32.mrf.mxu0
        %v611 = vadd.f32 %v382, %v610
        %v612 = vpop.f32.mrf.mxu0
        %v613 = vpop.f32.mrf.mxu0
        %v614 = vadd.f32 %v382, %v613
        %v615 = vpop.f32.mrf.mxu0
        %616 = vmatprep.mubr.bf16.mxu0 %v439
        %617 = vmatmul.mubr.bf16.gmra.mxu0 %v438
        %v618 = vpop.f32.mrf.mxu0
        %v619 = vadd.f32 %v382, %v618
        %v620 = vpop.f32.mrf.mxu0
        %v621 = vpop.f32.mrf.mxu0
        %v622 = vadd.f32 %v382, %v621
        %v623 = vpop.f32.mrf.mxu0
        %624 = vmatprep.mubr.bf16.mxu0 %v441
        %625 = vmatmul.mubr.bf16.gmra.mxu0 %v440
        %v626 = vpop.f32.mrf.mxu0
        %v627 = vadd.f32 %v382, %v626
        %v628 = vpop.f32.mrf.mxu0
        %v629 = vpop.f32.mrf.mxu0
        %v630 = vadd.f32 %v382, %v629
        %v631 = vpop.f32.mrf.mxu0
        %632 = vmatprep.mubr.bf16.mxu0 %v443
        %633 = vmatmul.mubr.bf16.gmra.mxu0 %v442
        %v634 = vpop.f32.mrf.mxu0
        %v635 = vadd.f32 %v382, %v634
        %v636 = vpop.f32.mrf.mxu0
        %v637 = vpop.f32.mrf.mxu0
        %v638 = vadd.f32 %v382, %v637
        %v639 = vpop.f32.mrf.mxu0
        %640 = vmatprep.mubr.bf16.mxu0 %v445
        %641 = vmatmul.mubr.bf16.gmra.mxu0 %v444
        %v642 = vpop.f32.mrf.mxu0
        %v643 = vadd.f32 %v382, %v642
        %v644 = vpop.f32.mrf.mxu0
        %v645 = vpop.f32.mrf.mxu0
        %v646 = vadd.f32 %v382, %v645
        %v647 = vpop.f32.mrf.mxu0
        %648 = vmatprep.mubr.bf16.mxu0 %v447
        %649 = vmatmul.mubr.bf16.gmra.mxu0 %v446
        %v650 = vpop.f32.mrf.mxu0
        %v651 = vadd.f32 %v382, %v650
        %v652 = vpop.f32.mrf.mxu0
        %v653 = vpop.f32.mrf.mxu0
        %v654 = vadd.f32 %v382, %v653
        %v655 = vpop.f32.mrf.mxu0
        %656 = vdwg.mxu0
        %v657 = vmax.f32 %v595, 0.0
        %v658 = vmax.f32 %v598, 0.0
        %v659 = vmax.f32 %v603, 0.0
        %v660 = vmax.f32 %v606, 0.0
        %v661 = vmax.f32 %v611, 0.0
        %v662 = vmax.f32 %v614, 0.0
        %v663 = vmax.f32 %v619, 0.0
        %v664 = vmax.f32 %v622, 0.0
        %v665 = vmax.f32 %v627, 0.0
        %v666 = vmax.f32 %v630, 0.0
        %v667 = vmax.f32 %v635, 0.0
        %v668 = vmax.f32 %v638, 0.0
        %v669 = vmax.f32 %v643, 0.0
        %v670 = vmax.f32 %v646, 0.0
        %v671 = vmax.f32 %v651, 0.0
        %v672 = vmax.f32 %v654, 0.0
        %v673 = vld [vmem:[#allocation2] sm:$0xff]
        %v674 = vld [vmem:[%s289] sm:$0xf]
        %v675 = vpack.c.bf16 %v658, %v657
        %v676 = vpack.c.bf16 %v660, %v659
        %v677 = vpack.c.bf16 %v662, %v661
        %v678 = vpack.c.bf16 %v664, %v663
        %v679 = vpack.c.bf16 %v666, %v665
        %v680 = vpack.c.bf16 %v668, %v667
        %v681 = vpack.c.bf16 %v670, %v669
        %v682 = vpack.c.bf16 %v672, %v671
        %683 = vmatprep.subr.bf16.mxu0 0
        %684 = vmatpush1.bf16.msra.mxu0 %v682
        %685 = vmatprep.subr.bf16.mxu0 0
        %686 = vmatpush1.bf16.msra.mxu0 %v681
        %687 = vmatprep.subr.bf16.mxu0 0
        %688 = vmatpush1.bf16.msra.mxu0 %v680
        %689 = vmatprep.subr.bf16.mxu0 0
        %690 = vmatpush1.bf16.msra.mxu0 %v679
        %691 = vmatprep.subr.bf16.mxu0 0
        %692 = vmatpush1.bf16.msra.mxu0 %v678
        %693 = vmatprep.subr.bf16.mxu0 0
        %694 = vmatpush1.bf16.msra.mxu0 %v677
        %695 = vmatprep.subr.bf16.mxu0 0
        %696 = vmatpush1.bf16.msra.mxu0 %v676
        %697 = vmatprep.subr.bf16.mxu0 0
        %698 = vmatpush1.bf16.msra.mxu0 %v675
        %699 = vmatprep.subr.bf16.mxu0 0
        %700 = vmatpush2.bf16.msra.mxu0 0
        %701 = vmatprep.subr.bf16.mxu0 0
        %702 = vmatpush2.bf16.msra.mxu0 0
        %703 = vmatprep.subr.bf16.mxu0 0
        %704 = vmatpush2.bf16.msra.mxu0 0
        %705 = vmatprep.subr.bf16.mxu0 0
        %706 = vmatpush2.bf16.msra.mxu0 0
        %707 = vmatprep.subr.bf16.mxu0 0
        %708 = vmatpush2.bf16.msra.mxu0 0
        %709 = vmatprep.subr.bf16.mxu0 0
        %710 = vmatpush2.bf16.msra.mxu0 0
        %711 = vmatprep.subr.bf16.mxu0 0
        %712 = vmatpush2.bf16.msra.mxu0 0
        %713 = vmatprep.subr.bf16.mxu0 0
        %714 = vmatpush2.bf16.msra.mxu0 0
        %715 = vmatprep.mubr.bf16.mxu0 0
        %716 = vmatmul.mubr.bf16.gmra.mxu0 %v674
        %v717 = vpop.f32.mrf.mxu0
        %v718 = vadd.f32 0.0, %v717
        %v719 = vpop.f32.mrf.mxu0
        %v720 = vpop.f32.mrf.mxu0
        %v721 = vpop.f32.mrf.mxu0
        %722 = vdwg.mxu0
        %v723 = vadd.f32 %v673, %v718
        %724 = vst [vmem:[#allocation2] sm:$0xff] %v723
        %p725 = scmp.eq.s32.totalorder %s22, 1
        // Predicated region
        $region65: #{tpu_custom_call.1} parent=43 // pred_check
          %p726 = pneg %p725
        $region66: #{tpu_custom_call.1} parent=43 // pred_check_branch
          %728 = sbr.rel (%p726) target = $region68
        $region67: #{tpu_custom_call.1} parent=43 // pred_region
          %v729 = vld [vmem:[#allocation2] sm:$0xff]
          %v730 = vpack.c.bf16 %v729, %v729
          %v731 = vld [vmem:[#allocation9] sm:$0xf]
          %v732 = vld [vmem:[#allocation9 + $0x4] sm:$0xf]
          %v733 = vld [vmem:[#allocation9 + $0x8] sm:$0xf]
          %v734 = vld [vmem:[#allocation9 + $0xc] sm:$0xf]
          %v735 = vld [vmem:[#allocation9 + $0x10] sm:$0xf]
          %v736 = vld [vmem:[#allocation9 + $0x14] sm:$0xf]
          %v737 = vld [vmem:[#allocation9 + $0x18] sm:$0xf]
          %v738 = vld [vmem:[#allocation9 + $0x1c] sm:$0xf]
          %v739 = vld [vmem:[#allocation9 + $0x20] sm:$0xf]
          %v740 = vld [vmem:[#allocation9 + $0x24] sm:$0xf]
          %v741 = vld [vmem:[#allocation9 + $0x28] sm:$0xf]
          %v742 = vld [vmem:[#allocation9 + $0x2c] sm:$0xf]
          %v743 = vld [vmem:[#allocation9 + $0x30] sm:$0xf]
          %v744 = vld [vmem:[#allocation9 + $0x34] sm:$0xf]
          %v745 = vld [vmem:[#allocation9 + $0x38] sm:$0xf]
          %v746 = vld [vmem:[#allocation9 + $0x3c] sm:$0xf]
          %v747 = vld [vmem:[%s5] sm:$0x1]
          %v749 = vlaneseq
          %v750 = vshrl.u32 %v749, 7
          %v751 = vsub.s32 0, %v750
          %v752 = vrot.slane %v747, %v751
          %v770 = vunpack.c.l.b16 %v731
          %v771 = vunpack.c.l.b16 %v732
          %v772 = vunpack.c.l.b16 %v733
          %v773 = vunpack.c.l.b16 %v734
          %v774 = vunpack.c.l.b16 %v735
          %v775 = vunpack.c.l.b16 %v736
          %v776 = vunpack.c.l.b16 %v737
          %v777 = vunpack.c.l.b16 %v738
          %v778 = vunpack.c.l.b16 %v739
          %v779 = vunpack.c.l.b16 %v740
          %v780 = vunpack.c.l.b16 %v741
          %v781 = vunpack.c.l.b16 %v742
          %v782 = vunpack.c.l.b16 %v743
          %v783 = vunpack.c.l.b16 %v744
          %v784 = vunpack.c.l.b16 %v745
          %v785 = vunpack.c.l.b16 %v746
          %v786 = vpack.c.b16 %v771, %v770
          %v787 = vpack.c.b16 %v773, %v772
          %v788 = vpack.c.b16 %v775, %v774
          %v789 = vpack.c.b16 %v777, %v776
          %v790 = vpack.c.b16 %v779, %v778
          %v791 = vpack.c.b16 %v781, %v780
          %v792 = vpack.c.b16 %v783, %v782
          %v793 = vpack.c.b16 %v785, %v784
          %802 = vmatprep.subr.bf16.mxu0 0
          %803 = vmatpush1.bf16.msra.mxu0 %v793
          %804 = vmatprep.subr.bf16.mxu0 0
          %805 = vmatpush1.bf16.msra.mxu0 %v792
          %806 = vmatprep.subr.bf16.mxu0 0
          %807 = vmatpush1.bf16.msra.mxu0 %v791
          %808 = vmatprep.subr.bf16.mxu0 0
          %809 = vmatpush1.bf16.msra.mxu0 %v790
          %810 = vmatprep.subr.bf16.mxu0 0
          %811 = vmatpush1.bf16.msra.mxu0 %v789
          %812 = vmatprep.subr.bf16.mxu0 0
          %813 = vmatpush1.bf16.msra.mxu0 %v788
          %814 = vmatprep.subr.bf16.mxu0 0
          %815 = vmatpush1.bf16.msra.mxu0 %v787
          %816 = vmatprep.subr.bf16.mxu0 0
          %817 = vmatpush1.bf16.msra.mxu0 %v786
          %818 = vmatprep.subr.bf16.mxu0 0
          %819 = vmatpush2.bf16.msra.mxu0 0
          %820 = vmatprep.subr.bf16.mxu0 0
          %821 = vmatpush2.bf16.msra.mxu0 0
          %822 = vmatprep.subr.bf16.mxu0 0
          %823 = vmatpush2.bf16.msra.mxu0 0
          %824 = vmatprep.subr.bf16.mxu0 0
          %825 = vmatpush2.bf16.msra.mxu0 0
          %826 = vmatprep.subr.bf16.mxu0 0
          %827 = vmatpush2.bf16.msra.mxu0 0
          %828 = vmatprep.subr.bf16.mxu0 0
          %829 = vmatpush2.bf16.msra.mxu0 0
          %830 = vmatprep.subr.bf16.mxu0 0
          %831 = vmatpush2.bf16.msra.mxu0 0
          %832 = vmatprep.subr.bf16.mxu0 0
          %833 = vmatpush2.bf16.msra.mxu0 0
          %834 = vmatprep.mubr.bf16.mxu0 0
          %835 = vmatmul.mubr.bf16.gmra.mxu0 %v730
          %v836 = vpop.f32.mrf.mxu0
          %v837 = vadd.f32 %v752, %v836
          %v838 = vpop.f32.mrf.mxu0
          %v839 = vpop.f32.mrf.mxu0
          %v840 = vpop.f32.mrf.mxu0
          %841 = vdwg.mxu0
          %842 = vst [vmem:[#allocation10] sm:$0xff] %v837
        $region68: #{tpu_custom_call.1} parent=43 // pred_fallthru
          _
        // Predicated region
        $region69: #{tpu_custom_call.1} parent=43 // pred_check
          %p843 = pneg %p171
        $region70: #{tpu_custom_call.1} parent=43 // pred_check_branch
          %845 = sbr.rel (%p843) target = $region72
        $region71: #{tpu_custom_call.1} parent=43 // pred_region
          %s847 = ssub.s32 128, 128
          %848 = vsyncadd [#allocation5], %s847
          %s850 = sshll.u32 [#allocation10], 4
          %s851 = int_to_ptr.vmem [resolvable:$true] %s850
          %853 = dma.vmem_to_hbm [thread:$0]  %s851, 128, %s6, [#allocation5]
        $region72: #{tpu_custom_call.1} parent=43 // pred_fallthru
          _
        // Predicated region
        $region73: #{tpu_custom_call.1} parent=43 // pred_check
          %p854 = pneg %p171
        $region74: #{tpu_custom_call.1} parent=43 // pred_check_branch
          %856 = sbr.rel (%p854) target = $region76
        $region75: #{tpu_custom_call.1} parent=43 // pred_region
          %857 = dma.done [#allocation5], 128
        $region76: #{tpu_custom_call.1} parent=43 // pred_fallthru
          _
      $region44: #{tpu_custom_call.1} parent=5 // pred_fallthru
        _
      %p858 = scmp.le.s32.totalorder 2, %s17
      // Predicated region
      $region77: #{tpu_custom_call.1} parent=5 // pred_check
        %p859 = pneg %p858
      $region78: #{tpu_custom_call.1} parent=5 // pred_check_branch
        %861 = sbr.rel (%p859) target = $region80
      $region79: #{tpu_custom_call.1} parent=5 // pred_region
        %s862 = ssub.s32 %s17, 2
      $region80: #{tpu_custom_call.1} parent=5 // pred_fallthru
        _
    $region6: #{tpu_custom_call.1} parent=1 // loop_footer
      %s21 = sadd.s32 1, %s17
    $region7: #{tpu_custom_call.1} parent=1 // loop_footer_branch
      %16 = sbr.rel target = $region3
    $region8: #{tpu_custom_call.1} parent=1 // loop_exit
      _
    %863 = vsyncpa [#allocation4], 1
    %s864 = scalar_lea.sflag [#allocation4], 1
    %865 = vsyncpa %s864, 1
    %866 = vsyncpa [#allocation7], 1
    %867 = vsyncpa [#allocation5], 1
    %s868 = scalar_lea.sflag [#allocation5], 1
    %869 = vsyncpa %s868, 1

</llo_original>
